<compile_context>
chip_gen: v6e
topology: v6e:2x2x1
jax: 0.10.0
libtpu: 0.0.40
codegen_flags: <defaults>
</compile_context>

<pallas_src>
import jax
import jax.numpy as jnp
from jax.experimental import pallas as pl
from jax.experimental.pallas import tpu as pltpu


def _round_up(x, m):
    return ((x + m - 1) // m) * m


def _make_kernel(num_inputs):
    """Kernel over one batch tile.  args =
       (x_0..x_{n-1}, w1_0..w1_{n-1}, b1, w2, b2, out_ref)."""

    def kernel(*args):
        x_refs = args[:num_inputs]
        w1_refs = args[num_inputs:2 * num_inputs]
        b1_ref, w2_ref, b2_ref = args[2 * num_inputs:2 * num_inputs + 3]
        out_ref = args[2 * num_inputs + 3]

        # ---- first layer (both heads fused, concat folded into partial dots) ----
        acc = jnp.dot(x_refs[0][...], w1_refs[0][...],
                      preferred_element_type=jnp.float32)
        for x_ref, w_ref in zip(x_refs[1:], w1_refs[1:]):
            acc += jnp.dot(x_ref[...], w_ref[...],
                           preferred_element_type=jnp.float32)
        h = jnp.maximum(acc + b1_ref[...], 0.0)

        # ---- second layer: block-diagonal fused weight, lane-dense output slab ----
        out_ref[...] = (jnp.dot(h, w2_ref[...],
                                preferred_element_type=jnp.float32)
                        + b2_ref[...])

    return kernel


def init_params(key, feat_dims, node, n_support):
    """Per-layer params matching nn.Linear's U(-1/sqrt(fan_in), 1/sqrt(fan_in))."""
    flatten_size = sum(feat_dims)
    ks = jax.random.split(key, 8)

    def lin(kw, kb, fan_in, fan_out):
        bound = 1.0 / jnp.sqrt(jnp.float32(fan_in))
        w = jax.random.uniform(kw, (fan_in, fan_out), jnp.float32, -bound, bound)
        b = jax.random.uniform(kb, (1, fan_out), jnp.float32, -bound, bound)
        return w, b

    w1a, b1a = lin(ks[0], ks[1], flatten_size, node)
    w2a, b2a = lin(ks[2], ks[3], node, n_support)
    w1b, b1b = lin(ks[4], ks[5], flatten_size, node)
    w2b, b2b = lin(ks[6], ks[7], node, n_support)
    return dict(w1a=w1a, b1a=b1a, w2a=w2a, b2a=b2a,
                w1b=w1b, b1b=b1b, w2b=w2b, b2b=b2b)


def fuse_params(params, feat_dims):
    """One-time prep: fuse the two heads, pad n_support lanes to a 128-multiple,
    and split the fused W1 by input-chunk rows (so the kernel never slices at
    non-aligned sublane offsets)."""
    node = params["w1a"].shape[1]
    n_support = params["w2a"].shape[1]
    n_pad = _round_up(n_support, 128)

    w1 = jnp.concatenate([params["w1a"], params["w1b"]], axis=1)   # (F, 2*node)
    w1_parts, off = [], 0
    for d in feat_dims:
        w1_parts.append(w1[off:off + d, :])
        off += d
    b1 = jnp.concatenate([params["b1a"], params["b1b"]], axis=1)   # (1, 2*node)

    w2 = jnp.zeros((2 * node, 2 * n_pad), jnp.float32)             # block-diag, padded
    w2 = w2.at[:node, :n_support].set(params["w2a"])
    w2 = w2.at[node:, n_pad:n_pad + n_support].set(params["w2b"])
    b2 = jnp.zeros((1, 2 * n_pad), jnp.float32)
    b2 = b2.at[:, :n_support].set(params["b2a"])
    b2 = b2.at[:, n_pad:n_pad + n_support].set(params["b2b"])

    return dict(w1_parts=tuple(w1_parts), b1=b1, w2=w2, b2=b2,
                node=node, n_support=n_support, n_pad=n_pad)


def critic_forward(xs, action, fused):
    """xs: list of (B, d_i) float32, action: (B, A) float32 -> (q1, q2)."""
    inputs = list(xs) + [action]
    feat_dims = [int(x.shape[-1]) for x in inputs]
    B = int(inputs[0].shape[0])
    node, n_support, n_pad = fused["node"], fused["n_support"], fused["n_pad"]

    # Batch tiling: 256-row tiles when the batch is large (MXU-friendly on
    # v6e/v7x, 2x128 on v5e), otherwise round the whole batch up to the
    # 8-sublane granule.  Zero-pad the trailing partial tile.
    tb = 256 if B >= 256 else _round_up(B, 8)
    b_pad = _round_up(B, tb)
    if b_pad != B:
        inputs = [jnp.pad(x, ((0, b_pad - B), (0, 0))) for x in inputs]

    n_in = len(inputs)
    grid = (b_pad // tb,)

    in_specs = (
        [pl.BlockSpec((tb, d), lambda i: (i, 0)) for d in feat_dims]          # activations
        + [pl.BlockSpec((d, 2 * node), lambda i: (0, 0)) for d in feat_dims]  # W1 row-chunks (resident)
        + [pl.BlockSpec((1, 2 * node), lambda i: (0, 0)),                     # b1
           pl.BlockSpec((2 * node, 2 * n_pad), lambda i: (0, 0)),             # W2 (resident)
           pl.BlockSpec((1, 2 * n_pad), lambda i: (0, 0))])                   # b2
    out_spec = pl.BlockSpec((tb, 2 * n_pad), lambda i: (i, 0))

    flatten = sum(feat_dims)
    flops = 2 * b_pad * (flatten * 2 * node + 2 * node * 2 * n_pad)
    bytes_accessed = 4 * (b_pad * flatten                 # activations in
                          + flatten * 2 * node            # W1
                          + 2 * node * 2 * n_pad          # W2
                          + b_pad * 2 * n_pad)            # output slab

    out = pl.pallas_call(
        _make_kernel(n_in),
        out_shape=jax.ShapeDtypeStruct((b_pad, 2 * n_pad), jnp.float32),
        grid=grid,
        in_specs=in_specs,
        out_specs=out_spec,
        compiler_params=pltpu.CompilerParams(
            dimension_semantics=("parallel",),
            vmem_limit_bytes=32 * 1024 * 1024),
        cost_estimate=pl.CostEstimate(flops=flops, transcendentals=0,
                                      bytes_accessed=bytes_accessed),
    )(*inputs, *fused["w1_parts"], fused["b1"], fused["w2"], fused["b2"])

    # TODO(synk): optional bf16 activation/weight cast on v6e/v7x (f32 kept
    # here to preserve the module's exact numerics).
    q1 = out[:B, :n_support]
    q2 = out[:B, n_pad:n_pad + n_support]
    return q1, q2


if __name__ == "__main__":
    key = jax.random.PRNGKey(0)

    # Small shapes consistent with the module: two vector observations + action.
    batch = 2
    state_size = [(8,), (6,)]       # vector states -> Identity preprocess
    action_size = (4,)
    node = 32                       # hidden width (module default 256, scaled down)
    n_support = 16                  # quantile support (module default 200, scaled down)

    feat_dims = [s[0] for s in state_size] + [action_size[0]]

    k_params, k_x0, k_x1, k_a = jax.random.split(key, 4)
    params = init_params(k_params, feat_dims, node, n_support)
    fused = fuse_params(params, feat_dims)

    xs = [jax.random.normal(k_x0, (batch, state_size[0][0]), jnp.float32),
          jax.random.normal(k_x1, (batch, state_size[1][0]), jnp.float32)]
    action = jax.random.normal(k_a, (batch, action_size[0]), jnp.float32)

    q1, q2 = critic_forward(xs, action, fused)
    jax.block_until_ready((q1, q2))

    # Reference: same math as the PyTorch module (concat -> Linear/ReLU/Linear x2).
    cated = jnp.concatenate(xs + [action], axis=-1)
    ref_q1 = jnp.maximum(cated @ params["w1a"] + params["b1a"], 0.0) @ params["w2a"] + params["b2a"]
    ref_q2 = jnp.maximum(cated @ params["w1b"] + params["b1b"], 0.0) @ params["w2b"] + params["b2b"]

    assert q1.shape == (batch, n_support) and q2.shape == (batch, n_support)
    assert jnp.allclose(q1, ref_q1, rtol=1e-4, atol=1e-4)
    assert jnp.allclose(q2, ref_q2, rtol=1e-4, atol=1e-4)

    print("KERNEL_OK")
</pallas_src>

<mosaic_0001>
module attributes {stable_mosaic.version = 11 : i64} {
  func.func @kernel(%arg0: i32, %arg1: memref<8x8xf32, #tpu.memory_space<vmem>>, %arg2: memref<8x6xf32, #tpu.memory_space<vmem>>, %arg3: memref<8x4xf32, #tpu.memory_space<vmem>>, %arg4: memref<8x64xf32, #tpu.memory_space<vmem>>, %arg5: memref<6x64xf32, #tpu.memory_space<vmem>>, %arg6: memref<4x64xf32, #tpu.memory_space<vmem>>, %arg7: memref<1x64xf32, #tpu.memory_space<vmem>>, %arg8: memref<64x256xf32, #tpu.memory_space<vmem>>, %arg9: memref<1x256xf32, #tpu.memory_space<vmem>>, %arg10: memref<8x256xf32, #tpu.memory_space<vmem>>) attributes {dimension_semantics = [#tpu.dimension_semantics<parallel>], iteration_bounds = array<i64: 1>, scalar_prefetch = 0 : i64, scratch_operands = 0 : i64, tpu.core_type = #tpu.core_type<tc>, window_params = [{transform_indices = @transform_0, window_bounds = array<i64: 8, 8>}, {transform_indices = @transform_1, window_bounds = array<i64: 8, 6>}, {transform_indices = @transform_2, window_bounds = array<i64: 8, 4>}, {pipeline_mode = #tpu.pipeline_mode<synchronous>, transform_indices = @transform_3, window_bounds = array<i64: 8, 64>}, {pipeline_mode = #tpu.pipeline_mode<synchronous>, transform_indices = @transform_4, window_bounds = array<i64: 6, 64>}, {pipeline_mode = #tpu.pipeline_mode<synchronous>, transform_indices = @transform_5, window_bounds = array<i64: 4, 64>}, {pipeline_mode = #tpu.pipeline_mode<synchronous>, transform_indices = @transform_6, window_bounds = array<i64: 1, 64>}, {pipeline_mode = #tpu.pipeline_mode<synchronous>, transform_indices = @transform_7, window_bounds = array<i64: 64, 256>}, {pipeline_mode = #tpu.pipeline_mode<synchronous>, transform_indices = @transform_8, window_bounds = array<i64: 1, 256>}, {transform_indices = @transform_9, window_bounds = array<i64: 8, 256>}]} {
    %c0 = arith.constant 0 : index
    %c0_0 = arith.constant 0 : index
    %0 = vector.load %arg1[%c0, %c0_0] : memref<8x8xf32, #tpu.memory_space<vmem>>, vector<8x8xf32>
    %c0_1 = arith.constant 0 : index
    %c0_2 = arith.constant 0 : index
    %1 = vector.load %arg4[%c0_1, %c0_2] : memref<8x64xf32, #tpu.memory_space<vmem>>, vector<8x64xf32>
    %cst = arith.constant dense<0.000000e+00> : vector<8x64xf32>
    %2 = tpu.matmul %0, %1, %cst {dimension_numbers = #tpu.dot_dimension_numbers<[1], [0], [0], [1], [0, 0, 1, 1], [], []>} : vector<8x8xf32>, vector<8x64xf32>, vector<8x64xf32> -> vector<8x64xf32>
    %c0_3 = arith.constant 0 : index
    %c0_4 = arith.constant 0 : index
    %3 = vector.load %arg2[%c0_3, %c0_4] : memref<8x6xf32, #tpu.memory_space<vmem>>, vector<8x6xf32>
    %c0_5 = arith.constant 0 : index
    %c0_6 = arith.constant 0 : index
    %4 = vector.load %arg5[%c0_5, %c0_6] : memref<6x64xf32, #tpu.memory_space<vmem>>, vector<6x64xf32>
    %cst_7 = arith.constant dense<0.000000e+00> : vector<8x64xf32>
    %5 = tpu.matmul %3, %4, %cst_7 {dimension_numbers = #tpu.dot_dimension_numbers<[1], [0], [0], [1], [0, 0, 1, 1], [], []>} : vector<8x6xf32>, vector<6x64xf32>, vector<8x64xf32> -> vector<8x64xf32>
    %6 = arith.addf %2, %5 : vector<8x64xf32>
    %c0_8 = arith.constant 0 : index
    %c0_9 = arith.constant 0 : index
    %7 = vector.load %arg3[%c0_8, %c0_9] : memref<8x4xf32, #tpu.memory_space<vmem>>, vector<8x4xf32>
    %c0_10 = arith.constant 0 : index
    %c0_11 = arith.constant 0 : index
    %8 = vector.load %arg6[%c0_10, %c0_11] : memref<4x64xf32, #tpu.memory_space<vmem>>, vector<4x64xf32>
    %cst_12 = arith.constant dense<0.000000e+00> : vector<8x64xf32>
    %9 = tpu.matmul %7, %8, %cst_12 {dimension_numbers = #tpu.dot_dimension_numbers<[1], [0], [0], [1], [0, 0, 1, 1], [], []>} : vector<8x4xf32>, vector<4x64xf32>, vector<8x64xf32> -> vector<8x64xf32>
    %10 = arith.addf %6, %9 : vector<8x64xf32>
    %c0_13 = arith.constant 0 : index
    %c0_14 = arith.constant 0 : index
    %11 = vector.load %arg7[%c0_13, %c0_14] : memref<1x64xf32, #tpu.memory_space<vmem>>, vector<1x64xf32>
    %12 = vector.broadcast %11 : vector<1x64xf32> to vector<8x64xf32>
    %13 = arith.addf %10, %12 : vector<8x64xf32>
    %cst_15 = arith.constant 0.000000e+00 : f32
    %14 = vector.broadcast %cst_15 : f32 to vector<8x64xf32>
    %15 = arith.maximumf %13, %14 : vector<8x64xf32>
    %c0_16 = arith.constant 0 : index
    %c0_17 = arith.constant 0 : index
    %16 = vector.load %arg8[%c0_16, %c0_17] : memref<64x256xf32, #tpu.memory_space<vmem>>, vector<64x256xf32>
    %cst_18 = arith.constant dense<0.000000e+00> : vector<8x256xf32>
    %17 = tpu.matmul %15, %16, %cst_18 {dimension_numbers = #tpu.dot_dimension_numbers<[1], [0], [0], [1], [0, 0, 1, 1], [], []>} : vector<8x64xf32>, vector<64x256xf32>, vector<8x256xf32> -> vector<8x256xf32>
    %c0_19 = arith.constant 0 : index
    %c0_20 = arith.constant 0 : index
    %18 = vector.load %arg9[%c0_19, %c0_20] : memref<1x256xf32, #tpu.memory_space<vmem>>, vector<1x256xf32>
    %19 = vector.broadcast %18 : vector<1x256xf32> to vector<8x256xf32>
    %20 = arith.addf %17, %19 : vector<8x256xf32>
    %c0_21 = arith.constant 0 : index
    %c0_22 = arith.constant 0 : index
    %21 = vector.load %arg10[%c0_21, %c0_22] : memref<8x256xf32, #tpu.memory_space<vmem>>, vector<8x256xf32>
    tpu.vector_store %arg10[%c0_21, %c0_22], %20 {strides = array<i32>} : memref<8x256xf32, #tpu.memory_space<vmem>>, vector<8x256xf32>,
    return
  }
  func.func @transform_0(%arg0: i32) -> (i32, i32) {
    %c0_i32 = arith.constant 0 : i32
    %c0_i32_0 = arith.constant 0 : i32
    return %arg0, %c0_i32 : i32, i32
  }
  func.func @transform_1(%arg0: i32) -> (i32, i32) {
    %c0_i32 = arith.constant 0 : i32
    %c0_i32_0 = arith.constant 0 : i32
    return %arg0, %c0_i32 : i32, i32
  }
  func.func @transform_2(%arg0: i32) -> (i32, i32) {
    %c0_i32 = arith.constant 0 : i32
    %c0_i32_0 = arith.constant 0 : i32
    return %arg0, %c0_i32 : i32, i32
  }
  func.func @transform_3(%arg0: i32) -> (i32, i32) {
    %c0_i32 = arith.constant 0 : i32
    %c0_i32_0 = arith.constant 0 : i32
    %c0_i32_1 = arith.constant 0 : i32
    return %c0_i32, %c0_i32_0 : i32, i32
  }
  func.func @transform_4(%arg0: i32) -> (i32, i32) {
    %c0_i32 = arith.constant 0 : i32
    %c0_i32_0 = arith.constant 0 : i32
    %c0_i32_1 = arith.constant 0 : i32
    return %c0_i32, %c0_i32_0 : i32, i32
  }
  func.func @transform_5(%arg0: i32) -> (i32, i32) {
    %c0_i32 = arith.constant 0 : i32
    %c0_i32_0 = arith.constant 0 : i32
    %c0_i32_1 = arith.constant 0 : i32
    return %c0_i32, %c0_i32_0 : i32, i32
  }
  func.func @transform_6(%arg0: i32) -> (i32, i32) {
    %c0_i32 = arith.constant 0 : i32
    %c0_i32_0 = arith.constant 0 : i32
    %c0_i32_1 = arith.constant 0 : i32
    return %c0_i32, %c0_i32_0 : i32, i32
  }
  func.func @transform_7(%arg0: i32) -> (i32, i32) {
    %c0_i32 = arith.constant 0 : i32
    %c0_i32_0 = arith.constant 0 : i32
    %c0_i32_1 = arith.constant 0 : i32
    return %c0_i32, %c0_i32_0 : i32, i32
  }
  func.func @transform_8(%arg0: i32) -> (i32, i32) {
    %c0_i32 = arith.constant 0 : i32
    %c0_i32_0 = arith.constant 0 : i32
    %c0_i32_1 = arith.constant 0 : i32
    return %c0_i32, %c0_i32_0 : i32, i32
  }
  func.func @transform_9(%arg0: i32) -> (i32, i32) {
    %c0_i32 = arith.constant 0 : i32
    %c0_i32_0 = arith.constant 0 : i32
    return %arg0, %c0_i32 : i32, i32
  }
}

</mosaic_0001>

<llo_original>
// kernel: tpu_custom_call.1
$region0: #{tpu_custom_call.1}
  #allocation0 [shape = 'u32[]', space=smem, size = 0x4, offset = 0x4, fixed_abs, tag = 'smem constant byte address 0x4 - core index']
  #allocation1 [shape = 'u32[144,128]{1,0:T(1,128)}', space=vmem, size = 0x12000, scoped, tag = 'internal scratch']
  %s0 = inlined_call_operand.vmem [shape: f32[8,8], index: 0, kind: input, shape index: {}]
  %s1 = inlined_call_operand.hbm [shape: f32[8,6], index: 1, kind: input, shape index: {}]
  %s2 = inlined_call_operand.vmem [shape: f32[8,4], index: 2, kind: input, shape index: {}]
  %s3 = inlined_call_operand.vmem [shape: f32[8,64], index: 3, kind: input, shape index: {}]
  %s4 = inlined_call_operand.hbm [shape: f32[6,64], index: 4, kind: input, shape index: {}]
  %s5 = inlined_call_operand.vmem [shape: f32[4,64], index: 5, kind: input, shape index: {}]
  %s6 = inlined_call_operand.hbm [shape: f32[1,64], index: 6, kind: input, shape index: {}]
  %s7 = inlined_call_operand.hbm [shape: f32[64,256], index: 7, kind: input, shape index: {}]
  %s8 = inlined_call_operand.vmem [shape: f32[1,256], index: 8, kind: input, shape index: {}]
  %s9 = inlined_call_operand.hbm [shape: f32[8,256], index: 9, kind: output, shape index: {}]
  %s10 = sld [smem:[#allocation0]]
  $region62: #{tpu_custom_call.1} parent=0
    _
  %s12 = ssub.s32 1, %s10
  %s13 = scalar_select 0, %s12, %s10
  $region1: #{tpu_custom_call.1} parent=0
    #allocation2 [shape = 'u8[4096]{0}', space=vmem, size = 0x1000, scoped, tag = 'input window, operand 1, single buffered']
    #allocation3 [shape = 's32[1]{0}', space=sflag, size = 0x4, scoped, tag = 'scoped memory for tpu_custom_call.1']
    #allocation4 [shape = 's32[1]{0}', space=sflag, size = 0x4, scoped, tag = 'scoped memory for tpu_custom_call.1']
    #allocation5 [shape = 'u8[4096]{0}', space=vmem, size = 0x1000, scoped, tag = 'input window, operand 4, single buffered']
    #allocation6 [shape = 's32[1]{0}', space=sflag, size = 0x4, scoped, tag = 'scoped memory for tpu_custom_call.1']
    #allocation7 [shape = 'u8[512]{0}', space=vmem, size = 0x400, scoped, tag = 'input window, operand 6, single buffered']
    #allocation8 [shape = 'u8[65536]{0}', space=vmem, size = 0x10000, scoped, tag = 'input window, operand 7, single buffered']
    #allocation9 [shape = 's32[1]{0}', space=sflag, size = 0x4, scoped, tag = 'scoped memory for tpu_custom_call.1']
    #allocation10 [shape = 'u8[8192]{0}', space=vmem, size = 0x2000, scoped, tag = 'output window, operand 0, single buffered']
    %14 = vsyncpa [#allocation3], 0
    %15 = vsyncpa [#allocation6], 0
    %16 = vsyncpa [#allocation9], 0
    %17 = vsyncpa [#allocation4], 0
    // Predicated region
    $region2: #{tpu_custom_call.1} parent=1 // pred_check
      _
    $region3: #{tpu_custom_call.1} parent=1 // pred_check_branch
      %19 = sbr.rel (0) target = $region5
    $region4: #{tpu_custom_call.1} parent=1 // pred_region
      _
    $region5: #{tpu_custom_call.1} parent=1 // pred_fallthru
      _
    // Predicated region
    $region6: #{tpu_custom_call.1} parent=1 // pred_check
      _
    $region7: #{tpu_custom_call.1} parent=1 // pred_check_branch
      %21 = sbr.rel (0) target = $region9
    $region8: #{tpu_custom_call.1} parent=1 // pred_region
      %s23 = ssub.s32 128, 128
      %24 = vsyncadd [#allocation3], %s23
      %s26 = sshll.u32 [#allocation2], 4
      %s27 = int_to_ptr.vmem [resolvable:$true] %s26
      %29 = dma.hbm_to_vmem [thread:$0]  %s1, 128, %s27, [#allocation3]
    $region9: #{tpu_custom_call.1} parent=1 // pred_fallthru
      _
    // Predicated region
    $region10: #{tpu_custom_call.1} parent=1 // pred_check
      _
    $region11: #{tpu_custom_call.1} parent=1 // pred_check_branch
      %31 = sbr.rel (0) target = $region13
    $region12: #{tpu_custom_call.1} parent=1 // pred_region
      _
    $region13: #{tpu_custom_call.1} parent=1 // pred_fallthru
      _
    // Predicated region
    $region14: #{tpu_custom_call.1} parent=1 // pred_check
      _
    $region15: #{tpu_custom_call.1} parent=1 // pred_check_branch
      %33 = sbr.rel (0) target = $region17
    $region16: #{tpu_custom_call.1} parent=1 // pred_region
      _
    $region17: #{tpu_custom_call.1} parent=1 // pred_fallthru
      _
    // Predicated region
    $region18: #{tpu_custom_call.1} parent=1 // pred_check
      _
    $region19: #{tpu_custom_call.1} parent=1 // pred_check_branch
      %35 = sbr.rel (0) target = $region21
    $region20: #{tpu_custom_call.1} parent=1 // pred_region
      %s37 = ssub.s32 128, 128
      %38 = vsyncadd [#allocation6], %s37
      %s40 = sshll.u32 [#allocation5], 4
      %s41 = int_to_ptr.vmem [resolvable:$true] %s40
      %43 = dma.hbm_to_vmem [thread:$0]  %s4, 128, %s41, [#allocation6]
    $region21: #{tpu_custom_call.1} parent=1 // pred_fallthru
      _
    // Predicated region
    $region22: #{tpu_custom_call.1} parent=1 // pred_check
      _
    $region23: #{tpu_custom_call.1} parent=1 // pred_check_branch
      %45 = sbr.rel (0) target = $region25
    $region24: #{tpu_custom_call.1} parent=1 // pred_region
      _
    $region25: #{tpu_custom_call.1} parent=1 // pred_fallthru
      _
    // Predicated region
    $region26: #{tpu_custom_call.1} parent=1 // pred_check
      _
    $region27: #{tpu_custom_call.1} parent=1 // pred_check_branch
      %47 = sbr.rel (0) target = $region29
    $region28: #{tpu_custom_call.1} parent=1 // pred_region
      %s49 = ssub.s32 16, 16
      %50 = vsyncadd [#allocation6], %s49
      %s52 = sshll.u32 [#allocation7], 4
      %s53 = int_to_ptr.vmem [resolvable:$true] %s52
      %55 = dma.hbm_to_vmem [thread:$0]  %s6, 16, %s53, [#allocation6]
    $region29: #{tpu_custom_call.1} parent=1 // pred_fallthru
      _
    // Predicated region
    $region30: #{tpu_custom_call.1} parent=1 // pred_check
      _
    $region31: #{tpu_custom_call.1} parent=1 // pred_check_branch
      %57 = sbr.rel (0) target = $region33
    $region32: #{tpu_custom_call.1} parent=1 // pred_region
      %s59 = ssub.s32 2048, 2048
      %60 = vsyncadd [#allocation9], %s59
      %s61 = sshll.u32 [#allocation8], 4
      %s62 = int_to_ptr.vmem [resolvable:$true] %s61
      %67 = dma.hbm_to_vmem [thread:$0]  %s7, 2048, %s62, [#allocation9], 256, 256, 16
    $region33: #{tpu_custom_call.1} parent=1 // pred_fallthru
      _
    // Predicated region
    $region34: #{tpu_custom_call.1} parent=1 // pred_check
      _
    $region35: #{tpu_custom_call.1} parent=1 // pred_check_branch
      %69 = sbr.rel (0) target = $region37
    $region36: #{tpu_custom_call.1} parent=1 // pred_region
      _
    $region37: #{tpu_custom_call.1} parent=1 // pred_fallthru
      _
    // Predicated region
    $region38: #{tpu_custom_call.1} parent=1 // pred_check
      _
    $region39: #{tpu_custom_call.1} parent=1 // pred_check_branch
      %71 = sbr.rel (0) target = $region41
    $region40: #{tpu_custom_call.1} parent=1 // pred_region
      %72 = dma.done [#allocation3], 128
    $region41: #{tpu_custom_call.1} parent=1 // pred_fallthru
      _
    // Predicated region
    $region42: #{tpu_custom_call.1} parent=1 // pred_check
      _
    $region43: #{tpu_custom_call.1} parent=1 // pred_check_branch
      %74 = sbr.rel (0) target = $region45
    $region44: #{tpu_custom_call.1} parent=1 // pred_region
      %75 = dma.done [#allocation6], 128
    $region45: #{tpu_custom_call.1} parent=1 // pred_fallthru
      _
    // Predicated region
    $region46: #{tpu_custom_call.1} parent=1 // pred_check
      _
    $region47: #{tpu_custom_call.1} parent=1 // pred_check_branch
      %77 = sbr.rel (0) target = $region49
    $region48: #{tpu_custom_call.1} parent=1 // pred_region
      %78 = dma.done [#allocation6], 16
    $region49: #{tpu_custom_call.1} parent=1 // pred_fallthru
      _
    // Predicated region
    $region50: #{tpu_custom_call.1} parent=1 // pred_check
      _
    $region51: #{tpu_custom_call.1} parent=1 // pred_check_branch
      %80 = sbr.rel (0) target = $region53
    $region52: #{tpu_custom_call.1} parent=1 // pred_region
      %81 = dma.done [#allocation9], 2048
    $region53: #{tpu_custom_call.1} parent=1 // pred_fallthru
      _
    %v82 = vld [vmem:[%s0] sm:$0xff]
    %v83 = vld [vmem:[%s3] sm:$0xff]
    %v84 = vld [vmem:[#allocation2] sm:$0xff]
    %v85 = vld [vmem:[#allocation5] sm:$0x3f]
    %vm86 = vcmask 48128
    %v88 = vsel %vm86, %v84, 0
    %vm90 = vcmask 1045504
    %v92 = vsel %vm90, %v85, 0
    %94 = vmatprep.subr.mxu0 0.0
    %95 = vmatpush1.msra.mxu0 0.0
    %96 = vmatprep.subr.mxu0 0.0
    %97 = vmatpush1.msra.mxu0 0.0
    %98 = vmatprep.subr.mxu0 0.0
    %99 = vmatpush1.msra.mxu0 0.0
    %100 = vmatprep.subr.mxu0 0.0
    %101 = vmatpush1.msra.mxu0 0.0
    %102 = vmatprep.subr.mxu0 0.0
    %103 = vmatpush1.msra.mxu0 0.0
    %104 = vmatprep.subr.mxu0 0.0
    %105 = vmatpush1.msra.mxu0 0.0
    %106 = vmatprep.subr.mxu0 0.0
    %107 = vmatpush1.msra.mxu0 0.0
    %108 = vmatprep.subr.mxu0 0.0
    %109 = vmatpush1.msra.mxu0 0.0
    %110 = vmatprep.subr.mxu0 0.0
    %111 = vmatpush1.msra.mxu0 0.0
    %112 = vmatprep.subr.mxu0 0.0
    %113 = vmatpush1.msra.mxu0 0.0
    %114 = vmatprep.subr.mxu0 0.0
    %115 = vmatpush1.msra.mxu0 0.0
    %116 = vmatprep.subr.mxu0 0.0
    %117 = vmatpush1.msra.mxu0 0.0
    %118 = vmatprep.subr.mxu0 0.0
    %119 = vmatpush1.msra.mxu0 0.0
    %120 = vmatprep.subr.mxu0 0.0
    %121 = vmatpush1.msra.mxu0 0.0
    %122 = vmatprep.subr.mxu0 0.0
    %123 = vmatpush1.msra.mxu0 0.0
    %124 = vmatprep.subr.mxu0 0.0
    %125 = vmatpush1.msra.mxu0 %v92
    %126 = vmatprep.subr.mxu0 0.0
    %127 = vmatpush2.msra.mxu0 0.0
    %128 = vmatprep.subr.mxu0 0.0
    %129 = vmatpush2.msra.mxu0 0.0
    %130 = vmatprep.subr.mxu0 0.0
    %131 = vmatpush2.msra.mxu0 0.0
    %132 = vmatprep.subr.mxu0 0.0
    %133 = vmatpush2.msra.mxu0 0.0
    %134 = vmatprep.subr.mxu0 0.0
    %135 = vmatpush2.msra.mxu0 0.0
    %136 = vmatprep.subr.mxu0 0.0
    %137 = vmatpush2.msra.mxu0 0.0
    %138 = vmatprep.subr.mxu0 0.0
    %139 = vmatpush2.msra.mxu0 0.0
    %140 = vmatprep.subr.mxu0 0.0
    %141 = vmatpush2.msra.mxu0 0.0
    %142 = vmatprep.subr.mxu0 0.0
    %143 = vmatpush2.msra.mxu0 0.0
    %144 = vmatprep.subr.mxu0 0.0
    %145 = vmatpush2.msra.mxu0 0.0
    %146 = vmatprep.subr.mxu0 0.0
    %147 = vmatpush2.msra.mxu0 0.0
    %148 = vmatprep.subr.mxu0 0.0
    %149 = vmatpush2.msra.mxu0 0.0
    %150 = vmatprep.subr.mxu0 0.0
    %151 = vmatpush2.msra.mxu0 0.0
    %152 = vmatprep.subr.mxu0 0.0
    %153 = vmatpush2.msra.mxu0 0.0
    %154 = vmatprep.subr.mxu0 0.0
    %155 = vmatpush2.msra.mxu0 0.0
    %156 = vmatprep.subr.mxu0 0.0
    %157 = vmatpush2.msra.mxu0 0.0
    %158 = vmatprep.mubr.f32.mxu0 0.0
    %159 = vmatmul.mubr.f32.gmra.mxu0 %v88
    %v160 = vpop.f32.mrf.mxu0
    %v161 = vadd.f32 0.0, %v160
    %v162 = vpop.f32.mrf.mxu0
    %163 = vdwg.mxu0
    %vm164 = vcmask 64512
    %v166 = vsel %vm164, %v82, 0
    %168 = vmatprep.subr.mxu0 0.0
    %169 = vmatpush1.msra.mxu0 0.0
    %170 = vmatprep.subr.mxu0 0.0
    %171 = vmatpush1.msra.mxu0 0.0
    %172 = vmatprep.subr.mxu0 0.0
    %173 = vmatpush1.msra.mxu0 0.0
    %174 = vmatprep.subr.mxu0 0.0
    %175 = vmatpush1.msra.mxu0 0.0
    %176 = vmatprep.subr.mxu0 0.0
    %177 = vmatpush1.msra.mxu0 0.0
    %178 = vmatprep.subr.mxu0 0.0
    %179 = vmatpush1.msra.mxu0 0.0
    %180 = vmatprep.subr.mxu0 0.0
    %181 = vmatpush1.msra.mxu0 0.0
    %182 = vmatprep.subr.mxu0 0.0
    %183 = vmatpush1.msra.mxu0 0.0
    %184 = vmatprep.subr.mxu0 0.0
    %185 = vmatpush1.msra.mxu0 0.0
    %186 = vmatprep.subr.mxu0 0.0
    %187 = vmatpush1.msra.mxu0 0.0
    %188 = vmatprep.subr.mxu0 0.0
    %189 = vmatpush1.msra.mxu0 0.0
    %190 = vmatprep.subr.mxu0 0.0
    %191 = vmatpush1.msra.mxu0 0.0
    %192 = vmatprep.subr.mxu0 0.0
    %193 = vmatpush1.msra.mxu0 0.0
    %194 = vmatprep.subr.mxu0 0.0
    %195 = vmatpush1.msra.mxu0 0.0
    %196 = vmatprep.subr.mxu0 0.0
    %197 = vmatpush1.msra.mxu0 0.0
    %198 = vmatprep.subr.mxu0 0.0
    %199 = vmatpush1.msra.mxu0 %v83
    %200 = vmatprep.subr.mxu0 0.0
    %201 = vmatpush2.msra.mxu0 0.0
    %202 = vmatprep.subr.mxu0 0.0
    %203 = vmatpush2.msra.mxu0 0.0
    %204 = vmatprep.subr.mxu0 0.0
    %205 = vmatpush2.msra.mxu0 0.0
    %206 = vmatprep.subr.mxu0 0.0
    %207 = vmatpush2.msra.mxu0 0.0
    %208 = vmatprep.subr.mxu0 0.0
    %209 = vmatpush2.msra.mxu0 0.0
    %210 = vmatprep.subr.mxu0 0.0
    %211 = vmatpush2.msra.mxu0 0.0
    %212 = vmatprep.subr.mxu0 0.0
    %213 = vmatpush2.msra.mxu0 0.0
    %214 = vmatprep.subr.mxu0 0.0
    %215 = vmatpush2.msra.mxu0 0.0
    %216 = vmatprep.subr.mxu0 0.0
    %217 = vmatpush2.msra.mxu0 0.0
    %218 = vmatprep.subr.mxu0 0.0
    %219 = vmatpush2.msra.mxu0 0.0
    %220 = vmatprep.subr.mxu0 0.0
    %221 = vmatpush2.msra.mxu0 0.0
    %222 = vmatprep.subr.mxu0 0.0
    %223 = vmatpush2.msra.mxu0 0.0
    %224 = vmatprep.subr.mxu0 0.0
    %225 = vmatpush2.msra.mxu0 0.0
    %226 = vmatprep.subr.mxu0 0.0
    %227 = vmatpush2.msra.mxu0 0.0
    %228 = vmatprep.subr.mxu0 0.0
    %229 = vmatpush2.msra.mxu0 0.0
    %230 = vmatprep.subr.mxu0 0.0
    %231 = vmatpush2.msra.mxu0 0.0
    %232 = vmatprep.mubr.f32.mxu0 0.0
    %233 = vmatmul.mubr.f32.gmra.mxu0 %v166
    %v234 = vpop.f32.mrf.mxu0
    %v235 = vadd.f32 %v161, %v234
    %v236 = vpop.f32.mrf.mxu0
    %237 = vdwg.mxu0
    %v238 = vld [vmem:[%s2] sm:$0xff]
    %v239 = vld [vmem:[%s5] sm:$0xf]
    %vm240 = vcmask 31744
    %v242 = vsel %vm240, %v238, 0
    %vm244 = vcmask 1043456
    %v246 = vsel %vm244, %v239, 0
    %248 = vmatprep.subr.mxu0 0.0
    %249 = vmatpush1.msra.mxu0 0.0
    %250 = vmatprep.subr.mxu0 0.0
    %251 = vmatpush1.msra.mxu0 0.0
    %252 = vmatprep.subr.mxu0 0.0
    %253 = vmatpush1.msra.mxu0 0.0
    %254 = vmatprep.subr.mxu0 0.0
    %255 = vmatpush1.msra.mxu0 0.0
    %256 = vmatprep.subr.mxu0 0.0
    %257 = vmatpush1.msra.mxu0 0.0
    %258 = vmatprep.subr.mxu0 0.0
    %259 = vmatpush1.msra.mxu0 0.0
    %260 = vmatprep.subr.mxu0 0.0
    %261 = vmatpush1.msra.mxu0 0.0
    %262 = vmatprep.subr.mxu0 0.0
    %263 = vmatpush1.msra.mxu0 0.0
    %264 = vmatprep.subr.mxu0 0.0
    %265 = vmatpush1.msra.mxu0 0.0
    %266 = vmatprep.subr.mxu0 0.0
    %267 = vmatpush1.msra.mxu0 0.0
    %268 = vmatprep.subr.mxu0 0.0
    %269 = vmatpush1.msra.mxu0 0.0
    %270 = vmatprep.subr.mxu0 0.0
    %271 = vmatpush1.msra.mxu0 0.0
    %272 = vmatprep.subr.mxu0 0.0
    %273 = vmatpush1.msra.mxu0 0.0
    %274 = vmatprep.subr.mxu0 0.0
    %275 = vmatpush1.msra.mxu0 0.0
    %276 = vmatprep.subr.mxu0 0.0
    %277 = vmatpush1.msra.mxu0 0.0
    %278 = vmatprep.subr.mxu0 0.0
    %279 = vmatpush1.msra.mxu0 %v246
    %280 = vmatprep.subr.mxu0 0.0
    %281 = vmatpush2.msra.mxu0 0.0
    %282 = vmatprep.subr.mxu0 0.0
    %283 = vmatpush2.msra.mxu0 0.0
    %284 = vmatprep.subr.mxu0 0.0
    %285 = vmatpush2.msra.mxu0 0.0
    %286 = vmatprep.subr.mxu0 0.0
    %287 = vmatpush2.msra.mxu0 0.0
    %288 = vmatprep.subr.mxu0 0.0
    %289 = vmatpush2.msra.mxu0 0.0
    %290 = vmatprep.subr.mxu0 0.0
    %291 = vmatpush2.msra.mxu0 0.0
    %292 = vmatprep.subr.mxu0 0.0
    %293 = vmatpush2.msra.mxu0 0.0
    %294 = vmatprep.subr.mxu0 0.0
    %295 = vmatpush2.msra.mxu0 0.0
    %296 = vmatprep.subr.mxu0 0.0
    %297 = vmatpush2.msra.mxu0 0.0
    %298 = vmatprep.subr.mxu0 0.0
    %299 = vmatpush2.msra.mxu0 0.0
    %300 = vmatprep.subr.mxu0 0.0
    %301 = vmatpush2.msra.mxu0 0.0
    %302 = vmatprep.subr.mxu0 0.0
    %303 = vmatpush2.msra.mxu0 0.0
    %304 = vmatprep.subr.mxu0 0.0
    %305 = vmatpush2.msra.mxu0 0.0
    %306 = vmatprep.subr.mxu0 0.0
    %307 = vmatpush2.msra.mxu0 0.0
    %308 = vmatprep.subr.mxu0 0.0
    %309 = vmatpush2.msra.mxu0 0.0
    %310 = vmatprep.subr.mxu0 0.0
    %311 = vmatpush2.msra.mxu0 0.0
    %312 = vmatprep.mubr.f32.mxu0 0.0
    %313 = vmatmul.mubr.f32.gmra.mxu0 %v242
    %v314 = vpop.f32.mrf.mxu0
    %v315 = vadd.f32 0.0, %v314
    %v316 = vpop.f32.mrf.mxu0
    %317 = vdwg.mxu0
    %v318 = vadd.f32 %v235, %v315
    %v319 = vld [vmem:[#allocation7] sm:$0x1]
    %v321 = vlaneseq
    %v322 = vshrl.u32 %v321, 7
    %v323 = vsub.s32 0, %v322
    %v324 = vrot.slane %v319, %v323
    %v326 = vadd.f32 %v318, %v324
    %v327 = vmax.f32 %v326, 0.0
    %v328 = vld [vmem:[#allocation8] sm:$0xff]
    %v329 = vld [vmem:[#allocation8 + $0x8] sm:$0xff]
    %v330 = vld [vmem:[#allocation8 + $0x10] sm:$0xff]
    %v331 = vld [vmem:[#allocation8 + $0x18] sm:$0xff]
    %v332 = vld [vmem:[#allocation8 + $0x20] sm:$0xff]
    %v333 = vld [vmem:[#allocation8 + $0x28] sm:$0xff]
    %v334 = vld [vmem:[#allocation8 + $0x30] sm:$0xff]
    %v335 = vld [vmem:[#allocation8 + $0x38] sm:$0xff]
    %v336 = vld [vmem:[#allocation8 + $0x40] sm:$0xff]
    %v337 = vld [vmem:[#allocation8 + $0x48] sm:$0xff]
    %v338 = vld [vmem:[#allocation8 + $0x50] sm:$0xff]
    %v339 = vld [vmem:[#allocation8 + $0x58] sm:$0xff]
    %v340 = vld [vmem:[#allocation8 + $0x60] sm:$0xff]
    %v341 = vld [vmem:[#allocation8 + $0x68] sm:$0xff]
    %v342 = vld [vmem:[#allocation8 + $0x70] sm:$0xff]
    %v343 = vld [vmem:[#allocation8 + $0x78] sm:$0xff]
    %v344 = vld [vmem:[%s8] sm:$0x3]
    %v346 = vlaneseq
    %v347 = vshrl.u32 %v346, 7
    %v348 = vsub.s32 0, %v347
    %v349 = vrot.slane %v344, %v348
    %v350 = vlaneseq
    %v351 = vshrl.u32 %v350, 7
    %v352 = vsub.s32 1, %v351
    %v353 = vrot.slane %v344, %v352
    %vm356 = vcmask 523264
    %v358 = vsel %vm356, %v327, 0
    %360 = vmatprep.subr.mxu0 0.0
    %361 = vmatpush1.msra.mxu0 0.0
    %362 = vmatprep.subr.mxu0 0.0
    %363 = vmatpush1.msra.mxu0 0.0
    %364 = vmatprep.subr.mxu0 0.0
    %365 = vmatpush1.msra.mxu0 0.0
    %366 = vmatprep.subr.mxu0 0.0
    %367 = vmatpush1.msra.mxu0 0.0
    %368 = vmatprep.subr.mxu0 0.0
    %369 = vmatpush1.msra.mxu0 0.0
    %370 = vmatprep.subr.mxu0 0.0
    %371 = vmatpush1.msra.mxu0 0.0
    %372 = vmatprep.subr.mxu0 0.0
    %373 = vmatpush1.msra.mxu0 0.0
    %374 = vmatprep.subr.mxu0 0.0
    %375 = vmatpush1.msra.mxu0 0.0
    %376 = vmatprep.subr.mxu0 %v343
    %377 = vmatpush1.msra.mxu0 %v342
    %378 = vmatprep.subr.mxu0 %v341
    %379 = vmatpush1.msra.mxu0 %v340
    %380 = vmatprep.subr.mxu0 %v339
    %381 = vmatpush1.msra.mxu0 %v338
    %382 = vmatprep.subr.mxu0 %v337
    %383 = vmatpush1.msra.mxu0 %v336
    %384 = vmatprep.subr.mxu0 %v335
    %385 = vmatpush1.msra.mxu0 %v334
    %386 = vmatprep.subr.mxu0 %v333
    %387 = vmatpush1.msra.mxu0 %v332
    %388 = vmatprep.subr.mxu0 %v331
    %389 = vmatpush1.msra.mxu0 %v330
    %390 = vmatprep.subr.mxu0 %v329
    %391 = vmatpush1.msra.mxu0 %v328
    %392 = vmatprep.subr.mxu0 0.0
    %393 = vmatpush2.msra.mxu0 0.0
    %394 = vmatprep.subr.mxu0 0.0
    %395 = vmatpush2.msra.mxu0 0.0
    %396 = vmatprep.subr.mxu0 0.0
    %397 = vmatpush2.msra.mxu0 0.0
    %398 = vmatprep.subr.mxu0 0.0
    %399 = vmatpush2.msra.mxu0 0.0
    %400 = vmatprep.subr.mxu0 0.0
    %401 = vmatpush2.msra.mxu0 0.0
    %402 = vmatprep.subr.mxu0 0.0
    %403 = vmatpush2.msra.mxu0 0.0
    %404 = vmatprep.subr.mxu0 0.0
    %405 = vmatpush2.msra.mxu0 0.0
    %406 = vmatprep.subr.mxu0 0.0
    %407 = vmatpush2.msra.mxu0 0.0
    %408 = vmatprep.subr.mxu0 0.0
    %409 = vmatpush2.msra.mxu0 0.0
    %410 = vmatprep.subr.mxu0 0.0
    %411 = vmatpush2.msra.mxu0 0.0
    %412 = vmatprep.subr.mxu0 0.0
    %413 = vmatpush2.msra.mxu0 0.0
    %414 = vmatprep.subr.mxu0 0.0
    %415 = vmatpush2.msra.mxu0 0.0
    %416 = vmatprep.subr.mxu0 0.0
    %417 = vmatpush2.msra.mxu0 0.0
    %418 = vmatprep.subr.mxu0 0.0
    %419 = vmatpush2.msra.mxu0 0.0
    %420 = vmatprep.subr.mxu0 0.0
    %421 = vmatpush2.msra.mxu0 0.0
    %422 = vmatprep.subr.mxu0 0.0
    %423 = vmatpush2.msra.mxu0 0.0
    %424 = vmatprep.mubr.f32.mxu0 0.0
    %425 = vmatmul.mubr.f32.gmra.mxu0 %v358
    %v426 = vpop.f32.mrf.mxu0
    %v427 = vadd.f32 %v349, %v426
    %v428 = vpop.f32.mrf.mxu0
    %v429 = vadd.f32 %v353, %v428
    %430 = vdwg.mxu0
    %431 = vst [vmem:[#allocation10] sm:$0xff] %v427
    %432 = vst [vmem:[#allocation10 + $0x8] sm:$0xff] %v429
    // Predicated region
    $region54: #{tpu_custom_call.1} parent=1 // pred_check
      _
    $region55: #{tpu_custom_call.1} parent=1 // pred_check_branch
      %434 = sbr.rel (0) target = $region57
    $region56: #{tpu_custom_call.1} parent=1 // pred_region
      %s436 = ssub.s32 256, 256
      %437 = vsyncadd [#allocation4], %s436
      %s439 = sshll.u32 [#allocation10], 4
      %s440 = int_to_ptr.vmem [resolvable:$true] %s439
      %442 = dma.vmem_to_hbm [thread:$0]  %s440, 256, %s9, [#allocation4]
    $region57: #{tpu_custom_call.1} parent=1 // pred_fallthru
      _
    // Predicated region
    $region58: #{tpu_custom_call.1} parent=1 // pred_check
      _
    $region59: #{tpu_custom_call.1} parent=1 // pred_check_branch
      %444 = sbr.rel (0) target = $region61
    $region60: #{tpu_custom_call.1} parent=1 // pred_region
      %445 = dma.done [#allocation4], 256
    $region61: #{tpu_custom_call.1} parent=1 // pred_fallthru
      _
    %446 = vsyncpa [#allocation3], 1
    %447 = vsyncpa [#allocation6], 1
    %448 = vsyncpa [#allocation9], 1
    %449 = vsyncpa [#allocation4], 1

</llo_original>
